<compile_context>
chip_gen: v7x
topology: tpu7x:2x2x1
jax: 0.10.0
libtpu: 0.0.40
codegen_flags: <defaults>
</compile_context>

<pallas_src>
import jax
import jax.numpy as jnp
from jax.experimental import pallas as pl
from jax.experimental.pallas import tpu as pltpu


def _mish_kernel(x_ref, o_ref):
    xf = x_ref[...].astype(jnp.float32)
    # mish(x) = x * tanh(softplus(x)) = x * t*(t+2) / (t*(t+2) + 2),  t = e^x.
    # Clamp the exp input: tanh(softplus(x)) saturates to 1 well before x=20,
    # so the clamp does not change the result but prevents f32 overflow.
    t = jnp.exp(jnp.minimum(xf, 20.0))
    num = t * (t + 2.0)
    den = num + 2.0
    r = pl.reciprocal(den, approx=True)   # cheap EUP op
    r = r * (2.0 - den * r)               # one Newton step (VPU) -> ~f32 exact
    o_ref[...] = (xf * num * r).astype(o_ref.dtype)


def mish(x, *, block_bytes=2 * 1024 * 1024):
    """Apply Mish elementwise to an array of any shape (e.g. NCHW)."""
    orig_shape = x.shape
    orig_dtype = x.dtype
    n = x.size
    x_flat = x.reshape(-1)

    # Pick the widest lane-dense last dim that divides numel -> copy-free path.
    lanes = None
    for cand in (1024, 512, 256, 128):
        if n % cand == 0:
            lanes = cand
            break
    padded = False
    if lanes is None:
        # Ragged size: pad only up to a multiple of 128 (not a whole tile).
        lanes = 128
        n_eff = pl.cdiv(n, lanes) * lanes
        x_flat = jnp.pad(x_flat, (0, n_eff - n))
        padded = True
    else:
        n_eff = n

    rows = n_eff // lanes
    itemsize = jnp.dtype(orig_dtype).itemsize
    row_bytes = lanes * itemsize
    # ~block_bytes per block; keep second-minor a multiple of 16 (bf16 packing).
    target_rows = max(16, (block_bytes // row_bytes) // 16 * 16)
    tile_rows = min(rows, target_rows)
    num_blocks = pl.cdiv(rows, tile_rows)

    in_spec_kwargs = {}
    if num_blocks >= 3:
        # Extra input buffer hides DMA latency jitter once blocks are large.
        in_spec_kwargs["pipeline_mode"] = pl.Buffered(3)

    out2d = pl.pallas_call(
        _mish_kernel,
        out_shape=jax.ShapeDtypeStruct((rows, lanes), orig_dtype),
        grid_spec=pltpu.PrefetchScalarGridSpec(
            num_scalar_prefetch=0,
            grid=(num_blocks,),
            in_specs=[pl.BlockSpec((tile_rows, lanes), lambda i: (i, 0),
                                   **in_spec_kwargs)],
            out_specs=pl.BlockSpec((tile_rows, lanes), lambda i: (i, 0)),
        ),
        compiler_params=pltpu.CompilerParams(
            dimension_semantics=("parallel",),
        ),
    )(x_flat.reshape(rows, lanes))

    if padded:
        return out2d.reshape(-1)[:n].reshape(orig_shape)
    return out2d.reshape(orig_shape)


def mish_reference(x):
    xf = x.astype(jnp.float32)
    sp = jnp.maximum(xf, 0.0) + jnp.log1p(jnp.exp(-jnp.abs(xf)))
    return (xf * jnp.tanh(sp)).astype(x.dtype)


if __name__ == "__main__":
    key = jax.random.PRNGKey(0)
    # NCHW input, as PyTorch conv-style modules expect.
    x = jax.random.normal(key, (2, 4, 16, 16), dtype=jnp.float32) * 3.0

    y = mish(x)
    jax.block_until_ready(y)

    y_ref = mish_reference(x)
    assert y.shape == x.shape and y.dtype == x.dtype
    assert jnp.allclose(y, y_ref, atol=2e-5, rtol=2e-5)

    # Also exercise the ragged (padded) path with a non-multiple-of-128 size.
    x2 = jax.random.normal(jax.random.PRNGKey(1), (2, 3, 7, 5),
                           dtype=jnp.float32) * 3.0
    y2 = mish(x2)
    jax.block_until_ready(y2)
    assert jnp.allclose(y2, mish_reference(x2), atol=2e-5, rtol=2e-5)

    print("KERNEL_OK")
</pallas_src>

<mosaic_0001>
module attributes {stable_mosaic.version = 11 : i64} {
  func.func @_mish_kernel(%arg0: i32, %arg1: memref<2x1024xf32, #tpu.memory_space<vmem>>, %arg2: memref<2x1024xf32, #tpu.memory_space<vmem>>) attributes {dimension_semantics = [#tpu.dimension_semantics<parallel>], iteration_bounds = array<i64: 1>, scalar_prefetch = 0 : i64, scratch_operands = 0 : i64, tpu.core_type = #tpu.core_type<tc>, window_params = [{transform_indices = @transform_0, window_bounds = array<i64: 2, 1024>}, {transform_indices = @transform_1, window_bounds = array<i64: 2, 1024>}]} {
    %c0 = arith.constant 0 : index
    %c0_0 = arith.constant 0 : index
    %0 = vector.load %arg1[%c0, %c0_0] : memref<2x1024xf32, #tpu.memory_space<vmem>>, vector<2x1024xf32>
    %cst = arith.constant 2.000000e+01 : f32
    %1 = vector.broadcast %cst : f32 to vector<2x1024xf32>
    %2 = arith.minimumf %0, %1 : vector<2x1024xf32>
    %3 = math.exp %2 : vector<2x1024xf32>
    %cst_1 = arith.constant 2.000000e+00 : f32
    %4 = vector.broadcast %cst_1 : f32 to vector<2x1024xf32>
    %5 = arith.addf %3, %4 : vector<2x1024xf32>
    %6 = arith.mulf %3, %5 : vector<2x1024xf32>
    %cst_2 = arith.constant 2.000000e+00 : f32
    %7 = vector.broadcast %cst_2 : f32 to vector<2x1024xf32>
    %8 = arith.addf %6, %7 : vector<2x1024xf32>
    %9 = tpu.reciprocal %8 {approx = true} : vector<2x1024xf32> -> vector<2x1024xf32>
    %10 = arith.mulf %8, %9 : vector<2x1024xf32>
    %cst_3 = arith.constant 2.000000e+00 : f32
    %11 = vector.broadcast %cst_3 : f32 to vector<2x1024xf32>
    %12 = arith.subf %11, %10 : vector<2x1024xf32>
    %13 = arith.mulf %9, %12 : vector<2x1024xf32>
    %14 = arith.mulf %0, %6 : vector<2x1024xf32>
    %15 = arith.mulf %14, %13 : vector<2x1024xf32>
    %c0_4 = arith.constant 0 : index
    %c0_5 = arith.constant 0 : index
    %16 = vector.load %arg2[%c0_4, %c0_5] : memref<2x1024xf32, #tpu.memory_space<vmem>>, vector<2x1024xf32>
    tpu.vector_store %arg2[%c0_4, %c0_5], %15 {strides = array<i32>} : memref<2x1024xf32, #tpu.memory_space<vmem>>, vector<2x1024xf32>,
    return
  }
  func.func @transform_0(%arg0: i32) -> (i32, i32) {
    %c0_i32 = arith.constant 0 : i32
    %c0_i32_0 = arith.constant 0 : i32
    return %arg0, %c0_i32 : i32, i32
  }
  func.func @transform_1(%arg0: i32) -> (i32, i32) {
    %c0_i32 = arith.constant 0 : i32
    %c0_i32_0 = arith.constant 0 : i32
    return %arg0, %c0_i32 : i32, i32
  }
}

</mosaic_0001>

<llo_original>
// kernel: tpu_custom_call.1
$region0: #{tpu_custom_call.1}
  #allocation0 [shape = 'u32[]', space=smem, size = 0x4, offset = 0x4, fixed_abs, tag = 'smem constant byte address 0x4 - core index']
  #allocation1 [shape = 'u32[144,128]{1,0:T(1,128)}', space=vmem, size = 0x12000, scoped, tag = 'internal scratch']
  %s0 = inlined_call_operand.hbm [shape: f32[2,1024], index: 0, kind: input, shape index: {}]
  %s1 = inlined_call_operand.hbm [shape: f32[2,1024], index: 1, kind: output, shape index: {}]
  %s2 = sld [smem:[#allocation0]]
  $region18: #{tpu_custom_call.1} parent=0
    _
  %s4 = ssub.s32 1, %s2
  %s5 = scalar_select 0, %s4, %s2
  $region1: #{tpu_custom_call.1} parent=0
    #allocation2 [shape = 'u8[8192]{0}', space=vmem, size = 0x2000, scoped, tag = 'input window, operand 0, single buffered']
    #allocation3 [shape = 's32[1]{0}', space=sflag, size = 0x4, scoped, tag = 'scoped memory for tpu_custom_call.1']
    #allocation4 [shape = 's32[1]{0}', space=sflag, size = 0x4, scoped, tag = 'scoped memory for tpu_custom_call.1']
    #allocation5 [shape = 'u8[8192]{0}', space=vmem, size = 0x2000, scoped, tag = 'output window, operand 0, single buffered']
    %6 = vsyncpa [#allocation3], 0
    %7 = vsyncpa [#allocation4], 0
    // Predicated region
    $region2: #{tpu_custom_call.1} parent=1 // pred_check
      _
    $region3: #{tpu_custom_call.1} parent=1 // pred_check_branch
      %9 = sbr.rel (0) target = $region5
    $region4: #{tpu_custom_call.1} parent=1 // pred_region
      %s11 = ssub.s32 256, 256
      %12 = vsyncadd [#allocation3], %s11
      %s14 = sshll.u32 [#allocation2], 4
      %s15 = int_to_ptr.vmem [resolvable:$true] %s14
      %17 = dma.hbm_to_vmem [thread:$0]  %s0, 256, %s15, [#allocation3]
    $region5: #{tpu_custom_call.1} parent=1 // pred_fallthru
      _
    // Predicated region
    $region6: #{tpu_custom_call.1} parent=1 // pred_check
      _
    $region7: #{tpu_custom_call.1} parent=1 // pred_check_branch
      %19 = sbr.rel (0) target = $region9
    $region8: #{tpu_custom_call.1} parent=1 // pred_region
      %20 = dma.done [#allocation3], 256
    $region9: #{tpu_custom_call.1} parent=1 // pred_fallthru
      _
    %v21 = vld [vmem:[#allocation2] sm:$0xff]
    %v22 = vld [vmem:[#allocation2 + $0x8] sm:$0xff]
    %v23 = vmin.f32 %v21, 20.0
    %v24 = vmin.f32 %v22, 20.0
    %v25 = vmul.f32 %v23, 1.442695
    %v26 = vpow.pop %v25
    %v27 = vmul.f32 %v24, 1.442695
    %v28 = vpow.pop %v27
    %v29 = vadd.f32 %v26, 2.0
    %v30 = vadd.f32 %v28, 2.0
    %v31 = vmul.f32 %v26, %v29
    %v32 = vmul.f32 %v28, %v30
    %v33 = vadd.f32 %v31, 2.0
    %v34 = vadd.f32 %v32, 2.0
    %v35 = vrcp.pop %v33
    %v36 = vrcp.pop %v34
    %v37 = vmul.f32 %v33, %v35
    %v38 = vmul.f32 %v34, %v36
    %v39 = vsub.f32 2.0, %v37
    %v40 = vsub.f32 2.0, %v38
    %v41 = vmul.f32 %v35, %v39
    %v42 = vmul.f32 %v36, %v40
    %v43 = vmul.f32 %v21, %v31
    %v44 = vmul.f32 %v22, %v32
    %v45 = vmul.f32 %v43, %v41
    %v46 = vmul.f32 %v44, %v42
    %47 = vst [vmem:[#allocation5] sm:$0xff] %v45
    %48 = vst [vmem:[#allocation5 + $0x8] sm:$0xff] %v46
    // Predicated region
    $region10: #{tpu_custom_call.1} parent=1 // pred_check
      _
    $region11: #{tpu_custom_call.1} parent=1 // pred_check_branch
      %50 = sbr.rel (0) target = $region13
    $region12: #{tpu_custom_call.1} parent=1 // pred_region
      %s52 = ssub.s32 256, 256
      %53 = vsyncadd [#allocation4], %s52
      %s55 = sshll.u32 [#allocation5], 4
      %s56 = int_to_ptr.vmem [resolvable:$true] %s55
      %58 = dma.vmem_to_hbm [thread:$0]  %s56, 256, %s1, [#allocation4]
    $region13: #{tpu_custom_call.1} parent=1 // pred_fallthru
      _
    // Predicated region
    $region14: #{tpu_custom_call.1} parent=1 // pred_check
      _
    $region15: #{tpu_custom_call.1} parent=1 // pred_check_branch
      %60 = sbr.rel (0) target = $region17
    $region16: #{tpu_custom_call.1} parent=1 // pred_region
      %61 = dma.done [#allocation4], 256
    $region17: #{tpu_custom_call.1} parent=1 // pred_fallthru
      _
    %62 = vsyncpa [#allocation3], 1
    %63 = vsyncpa [#allocation4], 1

</llo_original>
